<compile_context>
chip_gen: v7x
topology: tpu7x:2x2x1
jax: 0.10.0
libtpu: 0.0.40
codegen_flags: <defaults>
</compile_context>

<pallas_src>
import jax
import jax.numpy as jnp
from jax.experimental import pallas as pl
from jax.experimental.pallas import tpu as pltpu


def _linear_bias_small_kernel(x_ref, w_ref, b_ref, o_ref):
    # x_ref: (tile_m, Cin)  w_ref: (Cin, tile_n)  b_ref: (tile_m, tile_n) f32
    y = jnp.dot(x_ref[...], w_ref[...], preferred_element_type=jnp.float32)
    o_ref[...] = (y + b_ref[...]).astype(o_ref.dtype)


def _vmem_plan():
    """Generation-aware VMEM numbers: (planning budget, compiler limit)."""
    try:
        cap = int(pltpu.get_tpu_info().vmem_capacity_bytes)
    except Exception:
        cap = 64 * 1024 * 1024            # v7x-sized conservative fallback
    cap = max(cap, 32 * 1024 * 1024)
    return (cap * 3) // 5, (cap * 17) // 20


def _plan_tiles(M, Cin, Cout, x_bytes, w_bytes, out_bytes, budget,
                max_tile_m=None, max_tile_n=None):
    """Pick (tile_m, tile_n) so resident weight (x2: double-buffered) + bias
    block + double-buffered x/out tiles fit the VMEM planning budget."""
    # ---- N (Cout) tiling -----------------------------------------------------
    tn_fit = (budget // 2) // max(2 * Cin * w_bytes, 1)
    tn_cap = Cout if max_tile_n is None else min(Cout, max_tile_n)
    if tn_fit >= Cout and tn_cap >= Cout:
        tile_n = Cout                                   # whole weight resident
    else:
        tile_n = max(128, (min(tn_fit, tn_cap) // 128) * 128)  # lane-aligned
        tile_n = min(tile_n, Cout)

    # ---- M (= 3*B) tiling ----------------------------------------------------
    sub = 8 * max(1, 4 // x_bytes)        # sublane packing: f32 8, bf16 16, int8 32
    m_align = 3 * sub                     # also align to the (b, 3) bias cycle
    per_row = (2 * Cin * x_bytes          # double-buffered x tile
               + 2 * tile_n * out_bytes   # double-buffered out tile
               + 2 * tile_n * 4)          # f32 bias block (counted x2, conservative)
    rem = budget - 2 * Cin * tile_n * w_bytes
    tile_m = max(m_align, min(rem // per_row, 2048))
    if max_tile_m is not None:
        tile_m = min(tile_m, max_tile_m)
    if tile_m >= M:
        return M, tile_n                  # single full-extent M block
    tile_m = max(m_align, (tile_m // m_align) * m_align)
    # Prefer a tile that divides M (no ragged last tile) if it costs <= 2x steps.
    for t in range(tile_m, max(m_align, tile_m // 2) - 1, -m_align):
        if M % t == 0:
            return t, tile_n
    return tile_m, tile_n


def linear_bias_small(x, weight, bias, bias_norm_param=1e-6, *,
                      force_pallas=False, compute_dtype=None,
                      max_tile_m=None, max_tile_n=None):
    B, three, Cin = x.shape
    assert three == 3
    Cout, cin_w = weight.shape
    assert cin_w == Cin
    assert bias.shape == (Cout, 3)

    out_dtype = x.dtype
    if compute_dtype is not None:         # e.g. jnp.bfloat16 on v5e for
        x = x.astype(compute_dtype)       # compute-bound instantiations
        weight = weight.astype(compute_dtype)
    else:
        weight = weight.astype(x.dtype)

    # ---- bias normalization: O(Cout*3) plain-JAX work, done once ------------
    b32 = bias.astype(jnp.float32)
    norm = jnp.sqrt(jnp.sum(b32 * b32, axis=1, keepdims=True) + 1e-8)   # (Cout,1)
    norm = jnp.maximum(norm, jnp.asarray(bias_norm_param, jnp.float32))
    bias_t = (b32 / norm).T                                             # (3, Cout) f32

    # ---- tiny-shape fast path: launch-bound, let XLA fuse it -----------------
    if not force_pallas and 3 * B * Cin * Cout < (1 << 18):
        y = jnp.matmul(x, weight.T, preferred_element_type=jnp.float32)
        return (y + bias_t[None]).astype(out_dtype)

    M = 3 * B
    x_bytes = jnp.dtype(x.dtype).itemsize
    w_bytes = jnp.dtype(weight.dtype).itemsize
    out_bytes = jnp.dtype(out_dtype).itemsize
    budget, vmem_limit = _vmem_plan()
    tile_m, tile_n = _plan_tiles(M, Cin, Cout, x_bytes, w_bytes, out_bytes,
                                 budget, max_tile_m, max_tile_n)
    nm = pl.cdiv(M, tile_m)
    nn = pl.cdiv(Cout, tile_n)

    # Free, contiguous reshapes (no HBM pass): fold (B, 3) into M = 3B.
    x2 = x.reshape(M, Cin)
    w_t = weight.T                                    # one O(Cin*Cout) pass
    # One bias block serves every M tile: tiles start at multiples of 3 and
    # row r of a tile needs bias_t[r % 3].
    bias_big = jnp.tile(bias_t, (tile_m // 3, 1))     # (tile_m, Cout) f32

    cost = pl.CostEstimate(
        flops=2 * M * Cin * Cout,
        transcendentals=0,
        bytes_accessed=int(x_bytes * M * Cin + out_bytes * M * Cout
                           + w_bytes * Cin * Cout * (nm if nn > 1 else 1)
                           + 4 * tile_m * Cout),
    )

    out2 = pl.pallas_call(
        _linear_bias_small_kernel,
        out_shape=jax.ShapeDtypeStruct((M, Cout), out_dtype),
        grid_spec=pltpu.PrefetchScalarGridSpec(
            num_scalar_prefetch=0,
            grid=(nm, nn),                        # long M axis leads (megacore)
            in_specs=[
                pl.BlockSpec((tile_m, Cin), lambda m, n: (m, 0)),     # x tile
                pl.BlockSpec((Cin, tile_n), lambda m, n: (0, n)),     # weight
                pl.BlockSpec((tile_m, tile_n), lambda m, n: (0, n)),  # bias blk
            ],
            out_specs=pl.BlockSpec((tile_m, tile_n), lambda m, n: (m, n)),
        ),
        compiler_params=pltpu.CompilerParams(
            dimension_semantics=("parallel", "parallel"),
            vmem_limit_bytes=vmem_limit,
        ),
        cost_estimate=cost,
    )(x2, w_t, bias_big)

    return out2.reshape(B, 3, Cout)                   # free reshape back


if __name__ == "__main__":
    key = jax.random.PRNGKey(0)

    def make_inputs(k, B, Cin, Cout):
        kx, kw, kb = jax.random.split(k, 3)
        x = jax.random.normal(kx, (B, 3, Cin), dtype=jnp.float32)
        bound = (6.0 / (Cin + Cout)) ** 0.5           # xavier_uniform
        weight = jax.random.uniform(kw, (Cout, Cin), dtype=jnp.float32,
                                    minval=-bound, maxval=bound)
        bias = jax.random.normal(kb, (Cout, 3), dtype=jnp.float32)
        return x, weight, bias

    def reference(x, weight, bias, p=1e-6):
        bn = jnp.sqrt(jnp.sum(bias ** 2, axis=1) + 1e-8)
        bn = jnp.where(bn < p, p, bn)
        y = jnp.matmul(x, weight.T, precision=jax.lax.Precision.HIGHEST)
        return y + (bias / bn[:, None]).T[None]

    # 1) tiny shape (the module's typical use), Pallas path forced
    k1, k2 = jax.random.split(key)
    x, w, b = make_inputs(k1, B=2, Cin=32, Cout=32)
    out = jax.block_until_ready(linear_bias_small(x, w, b, force_pallas=True))
    assert out.shape == (2, 3, 32)
    assert jnp.allclose(out, reference(x, w, b), atol=2e-5, rtol=2e-5)
    # tiny shape, auto fast path (fused XLA, no pallas_call)
    out_fp = jax.block_until_ready(linear_bias_small(x, w, b))
    assert jnp.allclose(out_fp, reference(x, w, b), atol=2e-5, rtol=2e-5)

    # 2) multi-tile path: ragged M tiles + Cout (N) tiling
    x, w, b = make_inputs(k2, B=34, Cin=64, Cout=256)
    out = jax.block_until_ready(
        linear_bias_small(x, w, b, force_pallas=True,
                          max_tile_m=48, max_tile_n=128))
    assert out.shape == (34, 3, 256)
    assert jnp.allclose(out, reference(x, w, b), atol=1e-4, rtol=1e-4)

    print("KERNEL_OK")
</pallas_src>

<mosaic_0001>
module attributes {stable_mosaic.version = 11 : i64} {
  func.func @_linear_bias_small_kernel(%arg0: i32, %arg1: i32, %arg2: memref<6x32xf32, #tpu.memory_space<vmem>>, %arg3: memref<32x32xf32, #tpu.memory_space<vmem>>, %arg4: memref<6x32xf32, #tpu.memory_space<vmem>>, %arg5: memref<6x32xf32, #tpu.memory_space<vmem>>) attributes {dimension_semantics = [#tpu.dimension_semantics<parallel>, #tpu.dimension_semantics<parallel>], iteration_bounds = array<i64: 1, 1>, scalar_prefetch = 0 : i64, scratch_operands = 0 : i64, tpu.core_type = #tpu.core_type<tc>, window_params = [{transform_indices = @transform_0, window_bounds = array<i64: 6, 32>}, {transform_indices = @transform_1, window_bounds = array<i64: 32, 32>}, {transform_indices = @transform_2, window_bounds = array<i64: 6, 32>}, {transform_indices = @transform_3, window_bounds = array<i64: 6, 32>}]} {
    %c0 = arith.constant 0 : index
    %c0_0 = arith.constant 0 : index
    %0 = vector.load %arg2[%c0, %c0_0] : memref<6x32xf32, #tpu.memory_space<vmem>>, vector<6x32xf32>
    %c0_1 = arith.constant 0 : index
    %c0_2 = arith.constant 0 : index
    %1 = vector.load %arg3[%c0_1, %c0_2] : memref<32x32xf32, #tpu.memory_space<vmem>>, vector<32x32xf32>
    %cst = arith.constant dense<0.000000e+00> : vector<6x32xf32>
    %2 = tpu.matmul %0, %1, %cst {dimension_numbers = #tpu.dot_dimension_numbers<[1], [0], [0], [1], [0, 0, 1, 1], [], []>} : vector<6x32xf32>, vector<32x32xf32>, vector<6x32xf32> -> vector<6x32xf32>
    %c0_3 = arith.constant 0 : index
    %c0_4 = arith.constant 0 : index
    %3 = vector.load %arg4[%c0_3, %c0_4] : memref<6x32xf32, #tpu.memory_space<vmem>>, vector<6x32xf32>
    %4 = arith.addf %2, %3 : vector<6x32xf32>
    %c0_5 = arith.constant 0 : index
    %c0_6 = arith.constant 0 : index
    %5 = vector.load %arg5[%c0_5, %c0_6] : memref<6x32xf32, #tpu.memory_space<vmem>>, vector<6x32xf32>
    tpu.vector_store %arg5[%c0_5, %c0_6], %4 {strides = array<i32>} : memref<6x32xf32, #tpu.memory_space<vmem>>, vector<6x32xf32>,
    return
  }
  func.func @transform_0(%arg0: i32, %arg1: i32) -> (i32, i32) {
    %c0_i32 = arith.constant 0 : i32
    %c0_i32_0 = arith.constant 0 : i32
    return %arg0, %c0_i32 : i32, i32
  }
  func.func @transform_1(%arg0: i32, %arg1: i32) -> (i32, i32) {
    %c0_i32 = arith.constant 0 : i32
    %c0_i32_0 = arith.constant 0 : i32
    return %c0_i32, %arg1 : i32, i32
  }
  func.func @transform_2(%arg0: i32, %arg1: i32) -> (i32, i32) {
    %c0_i32 = arith.constant 0 : i32
    %c0_i32_0 = arith.constant 0 : i32
    return %c0_i32, %arg1 : i32, i32
  }
  func.func @transform_3(%arg0: i32, %arg1: i32) -> (i32, i32) {
    %c0_i32 = arith.constant 0 : i32
    return %arg0, %arg1 : i32, i32
  }
}

</mosaic_0001>

<llo_original>
// kernel: tpu_custom_call.1
$region0: #{tpu_custom_call.1}
  #allocation0 [shape = 'u32[]', space=smem, size = 0x4, offset = 0x4, fixed_abs, tag = 'smem constant byte address 0x4 - core index']
  #allocation1 [shape = 'u32[144,128]{1,0:T(1,128)}', space=vmem, size = 0x12000, scoped, tag = 'internal scratch']
  %s0 = inlined_call_operand.hbm [shape: f32[6,32], index: 0, kind: input, shape index: {}]
  %s1 = inlined_call_operand.hbm [shape: f32[32,32], index: 1, kind: input, shape index: {}]
  %s2 = inlined_call_operand.hbm [shape: f32[6,32], index: 2, kind: input, shape index: {}]
  %s3 = inlined_call_operand.hbm [shape: f32[6,32], index: 3, kind: output, shape index: {}]
  %s4 = sld [smem:[#allocation0]]
  $region34: #{tpu_custom_call.1} parent=0
    _
  %s6 = ssub.s32 1, %s4
  %s7 = scalar_select 0, %s6, %s4
  $region1: #{tpu_custom_call.1} parent=0
    #allocation2 [shape = 'u8[4096]{0}', space=vmem, size = 0x1000, scoped, tag = 'input window, operand 0, single buffered']
    #allocation3 [shape = 's32[1]{0}', space=sflag, size = 0x4, scoped, tag = 'scoped memory for tpu_custom_call.1']
    #allocation4 [shape = 's32[1]{0}', space=sflag, size = 0x4, scoped, tag = 'scoped memory for tpu_custom_call.1']
    #allocation5 [shape = 'u8[16384]{0}', space=vmem, size = 0x4000, scoped, tag = 'input window, operand 1, single buffered']
    #allocation6 [shape = 's32[1]{0}', space=sflag, size = 0x4, scoped, tag = 'scoped memory for tpu_custom_call.1']
    #allocation7 [shape = 'u8[4096]{0}', space=vmem, size = 0x1000, scoped, tag = 'input window, operand 2, single buffered']
    #allocation8 [shape = 'u8[4096]{0}', space=vmem, size = 0x1000, scoped, tag = 'output window, operand 0, single buffered']
    %8 = vsyncpa [#allocation3], 0
    %9 = vsyncpa [#allocation6], 0
    %10 = vsyncpa [#allocation4], 0
    // Predicated region
    $region2: #{tpu_custom_call.1} parent=1 // pred_check
      _
    $region3: #{tpu_custom_call.1} parent=1 // pred_check_branch
      %12 = sbr.rel (0) target = $region5
    $region4: #{tpu_custom_call.1} parent=1 // pred_region
      %s14 = ssub.s32 128, 128
      %15 = vsyncadd [#allocation3], %s14
      %s17 = sshll.u32 [#allocation2], 4
      %s18 = int_to_ptr.vmem [resolvable:$true] %s17
      %20 = dma.hbm_to_vmem [thread:$0]  %s0, 128, %s18, [#allocation3]
    $region5: #{tpu_custom_call.1} parent=1 // pred_fallthru
      _
    // Predicated region
    $region6: #{tpu_custom_call.1} parent=1 // pred_check
      _
    $region7: #{tpu_custom_call.1} parent=1 // pred_check_branch
      %22 = sbr.rel (0) target = $region9
    $region8: #{tpu_custom_call.1} parent=1 // pred_region
      %s24 = ssub.s32 512, 512
      %25 = vsyncadd [#allocation6], %s24
      %s26 = sshll.u32 [#allocation5], 4
      %s27 = int_to_ptr.vmem [resolvable:$true] %s26
      %32 = dma.hbm_to_vmem [thread:$0]  %s1, 512, %s27, [#allocation6], 128, 128, 8
    $region9: #{tpu_custom_call.1} parent=1 // pred_fallthru
      _
    // Predicated region
    $region10: #{tpu_custom_call.1} parent=1 // pred_check
      _
    $region11: #{tpu_custom_call.1} parent=1 // pred_check_branch
      %34 = sbr.rel (0) target = $region13
    $region12: #{tpu_custom_call.1} parent=1 // pred_region
      %s36 = ssub.s32 128, 128
      %37 = vsyncadd [#allocation6], %s36
      %s39 = sshll.u32 [#allocation7], 4
      %s40 = int_to_ptr.vmem [resolvable:$true] %s39
      %42 = dma.hbm_to_vmem [thread:$0]  %s2, 128, %s40, [#allocation6]
    $region13: #{tpu_custom_call.1} parent=1 // pred_fallthru
      _
    // Predicated region
    $region14: #{tpu_custom_call.1} parent=1 // pred_check
      _
    $region15: #{tpu_custom_call.1} parent=1 // pred_check_branch
      %44 = sbr.rel (0) target = $region17
    $region16: #{tpu_custom_call.1} parent=1 // pred_region
      %45 = dma.done [#allocation3], 128
    $region17: #{tpu_custom_call.1} parent=1 // pred_fallthru
      _
    // Predicated region
    $region18: #{tpu_custom_call.1} parent=1 // pred_check
      _
    $region19: #{tpu_custom_call.1} parent=1 // pred_check_branch
      %47 = sbr.rel (0) target = $region21
    $region20: #{tpu_custom_call.1} parent=1 // pred_region
      %48 = dma.done [#allocation6], 512
    $region21: #{tpu_custom_call.1} parent=1 // pred_fallthru
      _
    // Predicated region
    $region22: #{tpu_custom_call.1} parent=1 // pred_check
      _
    $region23: #{tpu_custom_call.1} parent=1 // pred_check_branch
      %50 = sbr.rel (0) target = $region25
    $region24: #{tpu_custom_call.1} parent=1 // pred_region
      %51 = dma.done [#allocation6], 128
    $region25: #{tpu_custom_call.1} parent=1 // pred_fallthru
      _
    %v52 = vld [vmem:[#allocation2] sm:$0x3f]
    %v53 = vld [vmem:[#allocation5] sm:$0xff]
    %v54 = vld [vmem:[#allocation5 + $0x8] sm:$0xff]
    %v55 = vld [vmem:[#allocation5 + $0x10] sm:$0xff]
    %v56 = vld [vmem:[#allocation5 + $0x18] sm:$0xff]
    %v57 = vld [vmem:[#allocation7] sm:$0x3f]
    %vm58 = vcmask 261120
    %v60 = vsel %vm58, %v52, 0
    %62 = vmatprep.subr.mxu0 0.0
    %63 = vmatpush1.msra.mxu0 %v53
    %64 = vmatprep.subr.mxu0 0.0
    %65 = vmatpush1.msra.mxu0 %v54
    %66 = vmatprep.subr.mxu0 0.0
    %67 = vmatpush1.msra.mxu0 %v55
    %68 = vmatprep.subr.mxu0 0.0
    %69 = vmatpush1.msra.mxu0 %v56
    %70 = vmatprep.subr.mxu0 0.0
    %71 = vmatpush1.msra.mxu0 0.0
    %72 = vmatprep.subr.mxu0 0.0
    %73 = vmatpush1.msra.mxu0 0.0
    %74 = vmatprep.subr.mxu0 0.0
    %75 = vmatpush1.msra.mxu0 0.0
    %76 = vmatprep.subr.mxu0 0.0
    %77 = vmatpush1.msra.mxu0 0.0
    %78 = vmatprep.subr.mxu0 0.0
    %79 = vmatpush1.msra.mxu0 0.0
    %80 = vmatprep.subr.mxu0 0.0
    %81 = vmatpush1.msra.mxu0 0.0
    %82 = vmatprep.subr.mxu0 0.0
    %83 = vmatpush1.msra.mxu0 0.0
    %84 = vmatprep.subr.mxu0 0.0
    %85 = vmatpush1.msra.mxu0 0.0
    %86 = vmatprep.subr.mxu0 0.0
    %87 = vmatpush1.msra.mxu0 0.0
    %88 = vmatprep.subr.mxu0 0.0
    %89 = vmatpush1.msra.mxu0 0.0
    %90 = vmatprep.subr.mxu0 0.0
    %91 = vmatpush1.msra.mxu0 0.0
    %92 = vmatprep.subr.mxu0 0.0
    %93 = vmatpush1.msra.mxu0 0.0
    %94 = vmatprep.subr.mxu0 0.0
    %95 = vmatpush1.msra.mxu0 0.0
    %96 = vmatprep.subr.mxu0 0.0
    %97 = vmatpush1.msra.mxu0 0.0
    %98 = vmatprep.subr.mxu0 0.0
    %99 = vmatpush1.msra.mxu0 0.0
    %100 = vmatprep.subr.mxu0 0.0
    %101 = vmatpush1.msra.mxu0 0.0
    %102 = vmatprep.subr.mxu0 0.0
    %103 = vmatpush1.msra.mxu0 0.0
    %104 = vmatprep.subr.mxu0 0.0
    %105 = vmatpush1.msra.mxu0 0.0
    %106 = vmatprep.subr.mxu0 0.0
    %107 = vmatpush1.msra.mxu0 0.0
    %108 = vmatprep.subr.mxu0 0.0
    %109 = vmatpush1.msra.mxu0 0.0
    %110 = vmatprep.subr.mxu0 0.0
    %111 = vmatpush1.msra.mxu0 0.0
    %112 = vmatprep.subr.mxu0 0.0
    %113 = vmatpush1.msra.mxu0 0.0
    %114 = vmatprep.subr.mxu0 0.0
    %115 = vmatpush1.msra.mxu0 0.0
    %116 = vmatprep.subr.mxu0 0.0
    %117 = vmatpush1.msra.mxu0 0.0
    %118 = vmatprep.subr.mxu0 0.0
    %119 = vmatpush1.msra.mxu0 0.0
    %120 = vmatprep.subr.mxu0 0.0
    %121 = vmatpush1.msra.mxu0 0.0
    %122 = vmatprep.subr.mxu0 0.0
    %123 = vmatpush1.msra.mxu0 0.0
    %124 = vmatprep.subr.mxu0 0.0
    %125 = vmatpush1.msra.mxu0 0.0
    %126 = vmatprep.mubr.f32.mxu0 0.0
    %127 = vmatmul.mubr.f32.gmra.mrb[0].mxu0 %v60
    %v128 = vpop.f32.mrb[0].mxu0
    %v129 = vadd.f32 %v57, %v128
    %v130 = vpop.f32.mrb[0].mxu0
    %131 = vdwg.mxu0
    %vm132 = vcmask 259072
    %133 = vst.msk [vmem:[#allocation8] sm:$0x3f] %vm132, %v129
    // Predicated region
    $region26: #{tpu_custom_call.1} parent=1 // pred_check
      _
    $region27: #{tpu_custom_call.1} parent=1 // pred_check_branch
      %135 = sbr.rel (0) target = $region29
    $region28: #{tpu_custom_call.1} parent=1 // pred_region
      %s137 = ssub.s32 128, 128
      %138 = vsyncadd [#allocation4], %s137
      %s140 = sshll.u32 [#allocation8], 4
      %s141 = int_to_ptr.vmem [resolvable:$true] %s140
      %143 = dma.vmem_to_hbm [thread:$0]  %s141, 128, %s3, [#allocation4]
    $region29: #{tpu_custom_call.1} parent=1 // pred_fallthru
      _
    // Predicated region
    $region30: #{tpu_custom_call.1} parent=1 // pred_check
      _
    $region31: #{tpu_custom_call.1} parent=1 // pred_check_branch
      %145 = sbr.rel (0) target = $region33
    $region32: #{tpu_custom_call.1} parent=1 // pred_region
      %146 = dma.done [#allocation4], 128
    $region33: #{tpu_custom_call.1} parent=1 // pred_fallthru
      _
    %147 = vsyncpa [#allocation3], 1
    %148 = vsyncpa [#allocation6], 1
    %149 = vsyncpa [#allocation4], 1

</llo_original>
